<compile_context>
chip_gen: v6e
topology: v6e:2x2x1
jax: 0.10.0
libtpu: 0.0.40
codegen_flags: <defaults>
</compile_context>

<pallas_src>
import jax
import jax.numpy as jnp
from jax import lax
from jax.experimental import pallas as pl
from jax.experimental.pallas import tpu as pltpu


def _round_up(x, m):
    return (x + m - 1) // m * m


def _text_sentiment_kernel(text_ref,     # (T_pad, 1)  i32, -1 = padding token
                           starts_ref,   # (TB, 1)     i32, bag start offsets
                           ends_ref,     # (TB, 1)     i32, bag end offsets
                           emb_ref,      # (V_pad, E_pad) f32 embedding table
                           fcw_ref,      # (E_pad, C_pad) f32 = fc.weight.T, padded
                           fcb_ref,      # (1, C_pad)  f32 bias, padded
                           out_ref):     # (TB, C_pad) f32 logits block
    t_pad = text_ref.shape[0]
    v_pad = emb_ref.shape[0]
    tb = out_ref.shape[0]

    tok = text_ref[...]          # (T_pad, 1)
    starts = starts_ref[...]     # (TB, 1)
    ends = ends_ref[...]         # (TB, 1)

    # Token -> vocab one-hot. Padding (-1) and out-of-range ids give all-zero
    # rows (no VMEM OOB reads, unlike a raw dynamic-slice gather).
    v_iota = lax.broadcasted_iota(jnp.int32, (t_pad, v_pad), 1)
    oh_tok = (v_iota == tok).astype(jnp.float32)            # (T_pad, V_pad)

    # Bag membership one-hot: token t belongs to bag b iff start_b <= t < end_b.
    t_iota = lax.broadcasted_iota(jnp.int32, (tb, t_pad), 1)
    oh_bag = ((t_iota >= starts) & (t_iota < ends)).astype(jnp.float32)  # (TB, T_pad)

    # Embedding gather + per-bag sum: two dense MXU matmuls.
    token_emb = jnp.dot(oh_tok, emb_ref[...],
                        preferred_element_type=jnp.float32)  # (T_pad, E_pad)
    bag_sum = jnp.dot(oh_bag, token_emb,
                      preferred_element_type=jnp.float32)    # (TB, E_pad)

    # mean mode: divide by bag length (empty bag -> zeros, like PyTorch).
    counts = (ends - starts).astype(jnp.float32)             # (TB, 1)
    inv = pl.reciprocal(jnp.maximum(counts, 1.0), approx=True)  # EUP slot
    mean = bag_sum * inv                                     # (TB, E_pad)

    # fc: mean @ W^T + b (weights pre-transposed & lane-padded in the wrapper).
    logits = jnp.dot(mean, fcw_ref[...],
                     preferred_element_type=jnp.float32) + fcb_ref[...]
    out_ref[...] = logits.astype(out_ref.dtype)


def text_sentiment_forward(text, offsets, emb_w, fc_w, fc_b, *, bag_block=128):
    """Pallas implementation of TextSentiment.forward(text, offsets)."""
    text = text.astype(jnp.int32)
    offsets = offsets.astype(jnp.int32)

    num_tokens = text.shape[0]
    num_bags = offsets.shape[0]
    vocab_size, embed_dim = emb_w.shape
    num_class = fc_w.shape[0]

    LANES = 128
    tb = bag_block
    t_pad = _round_up(max(num_tokens, 1), LANES)
    v_pad = _round_up(vocab_size, LANES)
    e_pad = _round_up(embed_dim, LANES)
    c_pad = _round_up(num_class, LANES)
    b_pad = _round_up(num_bags, tb)

    # Token stream as a column; -1 marks padding (contributes nothing).
    text_col = jnp.full((t_pad, 1), -1, jnp.int32).at[:num_tokens, 0].set(text)

    # Per-bag [start, end); padded bags get start == end == T (empty).
    offsets_ext = jnp.concatenate(
        [offsets, jnp.array([num_tokens], dtype=jnp.int32)])
    starts = jnp.full((b_pad, 1), num_tokens, jnp.int32)
    starts = starts.at[:num_bags, 0].set(offsets_ext[:num_bags])
    ends = jnp.full((b_pad, 1), num_tokens, jnp.int32)
    ends = ends.at[:num_bags, 0].set(offsets_ext[1:])

    # Zero-padded, lane-dense weights.
    emb_pad = jnp.zeros((v_pad, e_pad), jnp.float32).at[:vocab_size, :embed_dim].set(emb_w)
    fcw_pad = jnp.zeros((e_pad, c_pad), jnp.float32).at[:embed_dim, :num_class].set(fc_w.T)
    fcb_pad = jnp.zeros((1, c_pad), jnp.float32).at[0, :num_class].set(fc_b)

    grid_spec = pltpu.PrefetchScalarGridSpec(
        num_scalar_prefetch=0,
        grid=(b_pad // tb,),
        in_specs=[
            pl.BlockSpec((t_pad, 1), lambda i: (0, 0)),
            pl.BlockSpec((tb, 1), lambda i: (i, 0)),
            pl.BlockSpec((tb, 1), lambda i: (i, 0)),
            pl.BlockSpec((v_pad, e_pad), lambda i: (0, 0)),
            pl.BlockSpec((e_pad, c_pad), lambda i: (0, 0)),
            pl.BlockSpec((1, c_pad), lambda i: (0, 0)),
        ],
        out_specs=pl.BlockSpec((tb, c_pad), lambda i: (i, 0)),
    )

    out_padded = pl.pallas_call(
        _text_sentiment_kernel,
        out_shape=jax.ShapeDtypeStruct((b_pad, c_pad), jnp.float32),
        grid_spec=grid_spec,
        compiler_params=pltpu.CompilerParams(
            dimension_semantics=("parallel",),      # bag blocks are independent
            vmem_limit_bytes=32 * 1024 * 1024,
        ),
    )(text_col, starts, ends, emb_pad, fcw_pad, fcb_pad)

    return out_padded[:num_bags, :num_class]


def _reference_forward(text, offsets, emb_w, fc_w, fc_b):
    """Pure-JAX reference matching nn.EmbeddingBag(mode='mean') + nn.Linear."""
    T = text.shape[0]
    B = offsets.shape[0]
    ends = jnp.concatenate([offsets[1:], jnp.array([T], offsets.dtype)])
    outs = []
    for b in range(B):
        s, e = int(offsets[b]), int(ends[b])
        if e > s:
            outs.append(emb_w[text[s:e]].mean(axis=0))
        else:
            outs.append(jnp.zeros((emb_w.shape[1],), emb_w.dtype))
    embedded = jnp.stack(outs)                  # (B, E)
    return embedded @ fc_w.T + fc_b             # (B, C)


if __name__ == "__main__":
    # Model hyperparameters (small, consistent with the module's __init__).
    vocab_size = 32
    embed_dim = 32
    num_class = 4

    key = jax.random.PRNGKey(0)
    k_emb, k_fcw, k_text = jax.random.split(key, 3)

    # init_weights(): uniform(-0.5, 0.5) for embedding & fc weight, bias zero.
    initrange = 0.5
    emb_w = jax.random.uniform(k_emb, (vocab_size, embed_dim),
                               minval=-initrange, maxval=initrange,
                               dtype=jnp.float32)
    fc_w = jax.random.uniform(k_fcw, (num_class, embed_dim),
                              minval=-initrange, maxval=initrange,
                              dtype=jnp.float32)
    fc_b = jnp.zeros((num_class,), jnp.float32)

    # Example inputs: 2 bags over a flat token stream of length 8.
    text = jax.random.randint(k_text, (8,), 0, vocab_size, dtype=jnp.int32)
    offsets = jnp.array([0, 3], dtype=jnp.int32)   # bag0: tokens 0..2, bag1: 3..7

    out = text_sentiment_forward(text, offsets, emb_w, fc_w, fc_b)
    out = jax.block_until_ready(out)

    ref = _reference_forward(text, offsets, emb_w, fc_w, fc_b)
    assert out.shape == (offsets.shape[0], num_class)
    # Relaxed tolerance: MXU matmul path + approx (EUP) reciprocal.
    assert jnp.allclose(out, ref, atol=1e-2, rtol=1e-2), (out, ref)

    print("KERNEL_OK")
</pallas_src>

<mosaic_0001>
module attributes {stable_mosaic.version = 11 : i64} {
  func.func @_text_sentiment_kernel(%arg0: i32, %arg1: memref<128x1xi32, #tpu.memory_space<vmem>>, %arg2: memref<128x1xi32, #tpu.memory_space<vmem>>, %arg3: memref<128x1xi32, #tpu.memory_space<vmem>>, %arg4: memref<128x128xf32, #tpu.memory_space<vmem>>, %arg5: memref<128x128xf32, #tpu.memory_space<vmem>>, %arg6: memref<1x128xf32, #tpu.memory_space<vmem>>, %arg7: memref<128x128xf32, #tpu.memory_space<vmem>>) attributes {dimension_semantics = [#tpu.dimension_semantics<parallel>], iteration_bounds = array<i64: 1>, scalar_prefetch = 0 : i64, scratch_operands = 0 : i64, tpu.core_type = #tpu.core_type<tc>, window_params = [{pipeline_mode = #tpu.pipeline_mode<synchronous>, transform_indices = @transform_0, window_bounds = array<i64: 128, 1>}, {transform_indices = @transform_1, window_bounds = array<i64: 128, 1>}, {transform_indices = @transform_2, window_bounds = array<i64: 128, 1>}, {pipeline_mode = #tpu.pipeline_mode<synchronous>, transform_indices = @transform_3, window_bounds = array<i64: 128, 128>}, {pipeline_mode = #tpu.pipeline_mode<synchronous>, transform_indices = @transform_4, window_bounds = array<i64: 128, 128>}, {pipeline_mode = #tpu.pipeline_mode<synchronous>, transform_indices = @transform_5, window_bounds = array<i64: 1, 128>}, {transform_indices = @transform_6, window_bounds = array<i64: 128, 128>}]} {
    %c0 = arith.constant 0 : index
    %c0_0 = arith.constant 0 : index
    %0 = vector.load %arg1[%c0, %c0_0] : memref<128x1xi32, #tpu.memory_space<vmem>>, vector<128x1xi32>
    %c0_1 = arith.constant 0 : index
    %c0_2 = arith.constant 0 : index
    %1 = vector.load %arg2[%c0_1, %c0_2] : memref<128x1xi32, #tpu.memory_space<vmem>>, vector<128x1xi32>
    %c0_3 = arith.constant 0 : index
    %c0_4 = arith.constant 0 : index
    %2 = vector.load %arg3[%c0_3, %c0_4] : memref<128x1xi32, #tpu.memory_space<vmem>>, vector<128x1xi32>
    %3 = tpu.iota {dimensions = array<i32: 1>} : vector<128x128xi32>
    %4 = vector.broadcast %0 : vector<128x1xi32> to vector<128x128xi32>
    %5 = arith.cmpi eq, %3, %4 : vector<128x128xi32>
    %6 = arith.extui %5 : vector<128x128xi1> to vector<128x128xi32>
    %7 = arith.sitofp %6 : vector<128x128xi32> to vector<128x128xf32>
    %8 = tpu.iota {dimensions = array<i32: 1>} : vector<128x128xi32>
    %9 = vector.broadcast %1 : vector<128x1xi32> to vector<128x128xi32>
    %10 = arith.cmpi sge, %8, %9 : vector<128x128xi32>
    %11 = vector.broadcast %2 : vector<128x1xi32> to vector<128x128xi32>
    %12 = arith.cmpi slt, %8, %11 : vector<128x128xi32>
    %13 = arith.andi %10, %12 : vector<128x128xi1>
    %14 = arith.extui %13 : vector<128x128xi1> to vector<128x128xi32>
    %15 = arith.sitofp %14 : vector<128x128xi32> to vector<128x128xf32>
    %c0_5 = arith.constant 0 : index
    %c0_6 = arith.constant 0 : index
    %16 = vector.load %arg4[%c0_5, %c0_6] : memref<128x128xf32, #tpu.memory_space<vmem>>, vector<128x128xf32>
    %cst = arith.constant dense<0.000000e+00> : vector<128x128xf32>
    %17 = tpu.matmul %7, %16, %cst {dimension_numbers = #tpu.dot_dimension_numbers<[1], [0], [0], [1], [0, 0, 1, 1], [], []>} : vector<128x128xf32>, vector<128x128xf32>, vector<128x128xf32> -> vector<128x128xf32>
    %cst_7 = arith.constant dense<0.000000e+00> : vector<128x128xf32>
    %18 = tpu.matmul %15, %17, %cst_7 {dimension_numbers = #tpu.dot_dimension_numbers<[1], [0], [0], [1], [0, 0, 1, 1], [], []>} : vector<128x128xf32>, vector<128x128xf32>, vector<128x128xf32> -> vector<128x128xf32>
    %19 = arith.subi %2, %1 : vector<128x1xi32>
    %20 = arith.sitofp %19 : vector<128x1xi32> to vector<128x1xf32>
    %cst_8 = arith.constant 1.000000e+00 : f32
    %21 = vector.broadcast %cst_8 : f32 to vector<128x1xf32>
    %22 = arith.maximumf %20, %21 : vector<128x1xf32>
    %23 = tpu.reciprocal %22 {approx = true} : vector<128x1xf32> -> vector<128x1xf32>
    %24 = vector.broadcast %23 : vector<128x1xf32> to vector<128x128xf32>
    %25 = arith.mulf %18, %24 : vector<128x128xf32>
    %c0_9 = arith.constant 0 : index
    %c0_10 = arith.constant 0 : index
    %26 = vector.load %arg5[%c0_9, %c0_10] : memref<128x128xf32, #tpu.memory_space<vmem>>, vector<128x128xf32>
    %cst_11 = arith.constant dense<0.000000e+00> : vector<128x128xf32>
    %27 = tpu.matmul %25, %26, %cst_11 {dimension_numbers = #tpu.dot_dimension_numbers<[1], [0], [0], [1], [0, 0, 1, 1], [], []>} : vector<128x128xf32>, vector<128x128xf32>, vector<128x128xf32> -> vector<128x128xf32>
    %c0_12 = arith.constant 0 : index
    %c0_13 = arith.constant 0 : index
    %28 = vector.load %arg6[%c0_12, %c0_13] : memref<1x128xf32, #tpu.memory_space<vmem>>, vector<1x128xf32>
    %29 = vector.broadcast %28 : vector<1x128xf32> to vector<128x128xf32>
    %30 = arith.addf %27, %29 : vector<128x128xf32>
    %c0_14 = arith.constant 0 : index
    %c0_15 = arith.constant 0 : index
    %31 = vector.load %arg7[%c0_14, %c0_15] : memref<128x128xf32, #tpu.memory_space<vmem>>, vector<128x128xf32>
    tpu.vector_store %arg7[%c0_14, %c0_15], %30 {strides = array<i32>} : memref<128x128xf32, #tpu.memory_space<vmem>>, vector<128x128xf32>,
    return
  }
  func.func @transform_0(%arg0: i32) -> (i32, i32) {
    %c0_i32 = arith.constant 0 : i32
    %c0_i32_0 = arith.constant 0 : i32
    %c0_i32_1 = arith.constant 0 : i32
    return %c0_i32, %c0_i32_0 : i32, i32
  }
  func.func @transform_1(%arg0: i32) -> (i32, i32) {
    %c0_i32 = arith.constant 0 : i32
    %c0_i32_0 = arith.constant 0 : i32
    return %arg0, %c0_i32 : i32, i32
  }
  func.func @transform_2(%arg0: i32) -> (i32, i32) {
    %c0_i32 = arith.constant 0 : i32
    %c0_i32_0 = arith.constant 0 : i32
    return %arg0, %c0_i32 : i32, i32
  }
  func.func @transform_3(%arg0: i32) -> (i32, i32) {
    %c0_i32 = arith.constant 0 : i32
    %c0_i32_0 = arith.constant 0 : i32
    %c0_i32_1 = arith.constant 0 : i32
    return %c0_i32, %c0_i32_0 : i32, i32
  }
  func.func @transform_4(%arg0: i32) -> (i32, i32) {
    %c0_i32 = arith.constant 0 : i32
    %c0_i32_0 = arith.constant 0 : i32
    %c0_i32_1 = arith.constant 0 : i32
    return %c0_i32, %c0_i32_0 : i32, i32
  }
  func.func @transform_5(%arg0: i32) -> (i32, i32) {
    %c0_i32 = arith.constant 0 : i32
    %c0_i32_0 = arith.constant 0 : i32
    %c0_i32_1 = arith.constant 0 : i32
    return %c0_i32, %c0_i32_0 : i32, i32
  }
  func.func @transform_6(%arg0: i32) -> (i32, i32) {
    %c0_i32 = arith.constant 0 : i32
    %c0_i32_0 = arith.constant 0 : i32
    return %arg0, %c0_i32 : i32, i32
  }
}

</mosaic_0001>

<llo_original>
// kernel: tpu_custom_call.1
$region0: #{tpu_custom_call.1}
  #allocation0 [shape = 'u32[]', space=smem, size = 0x4, offset = 0x4, fixed_abs, tag = 'smem constant byte address 0x4 - core index']
  #allocation1 [shape = 'u32[144,128]{1,0:T(1,128)}', space=vmem, size = 0x12000, scoped, tag = 'internal scratch']
  %s0 = inlined_call_operand.vmem [shape: s32[128,1], index: 0, kind: input, shape index: {}]
  %s1 = inlined_call_operand.vmem [shape: s32[128,1], index: 1, kind: input, shape index: {}]
  %s2 = inlined_call_operand.vmem [shape: s32[128,1], index: 2, kind: input, shape index: {}]
  %s3 = inlined_call_operand.vmem [shape: f32[128,128], index: 3, kind: input, shape index: {}]
  %s4 = inlined_call_operand.vmem [shape: f32[128,128], index: 4, kind: input, shape index: {}]
  %s5 = inlined_call_operand.vmem [shape: f32[1,128], index: 5, kind: input, shape index: {}]
  %s6 = inlined_call_operand.hbm [shape: f32[128,128], index: 6, kind: output, shape index: {}]
  %s7 = sld [smem:[#allocation0]]
  $region34: #{tpu_custom_call.1} parent=0
    _
  %s9 = ssub.s32 1, %s7
  %s10 = scalar_select 0, %s9, %s7
  $region1: #{tpu_custom_call.1} parent=0
    #allocation2 [shape = 'u8[65536]{0}', space=vmem, size = 0x10000, scoped, tag = 'output window, operand 0, single buffered']
    #allocation3 [shape = 's32[1]{0}', space=sflag, size = 0x4, scoped, tag = 'scoped memory for tpu_custom_call.1']
    %11 = vsyncpa [#allocation3], 0
    // Predicated region
    $region2: #{tpu_custom_call.1} parent=1 // pred_check
      _
    $region3: #{tpu_custom_call.1} parent=1 // pred_check_branch
      %13 = sbr.rel (0) target = $region5
    $region4: #{tpu_custom_call.1} parent=1 // pred_region
      _
    $region5: #{tpu_custom_call.1} parent=1 // pred_fallthru
      _
    // Predicated region
    $region6: #{tpu_custom_call.1} parent=1 // pred_check
      _
    $region7: #{tpu_custom_call.1} parent=1 // pred_check_branch
      %15 = sbr.rel (0) target = $region9
    $region8: #{tpu_custom_call.1} parent=1 // pred_region
      _
    $region9: #{tpu_custom_call.1} parent=1 // pred_fallthru
      _
    // Predicated region
    $region10: #{tpu_custom_call.1} parent=1 // pred_check
      _
    $region11: #{tpu_custom_call.1} parent=1 // pred_check_branch
      %17 = sbr.rel (0) target = $region13
    $region12: #{tpu_custom_call.1} parent=1 // pred_region
      _
    $region13: #{tpu_custom_call.1} parent=1 // pred_fallthru
      _
    // Predicated region
    $region14: #{tpu_custom_call.1} parent=1 // pred_check
      _
    $region15: #{tpu_custom_call.1} parent=1 // pred_check_branch
      %19 = sbr.rel (0) target = $region17
    $region16: #{tpu_custom_call.1} parent=1 // pred_region
      _
    $region17: #{tpu_custom_call.1} parent=1 // pred_fallthru
      _
    // Predicated region
    $region18: #{tpu_custom_call.1} parent=1 // pred_check
      _
    $region19: #{tpu_custom_call.1} parent=1 // pred_check_branch
      %21 = sbr.rel (0) target = $region21
    $region20: #{tpu_custom_call.1} parent=1 // pred_region
      _
    $region21: #{tpu_custom_call.1} parent=1 // pred_fallthru
      _
    // Predicated region
    $region22: #{tpu_custom_call.1} parent=1 // pred_check
      _
    $region23: #{tpu_custom_call.1} parent=1 // pred_check_branch
      %23 = sbr.rel (0) target = $region25
    $region24: #{tpu_custom_call.1} parent=1 // pred_region
      _
    $region25: #{tpu_custom_call.1} parent=1 // pred_fallthru
      _
    %v24 = vld [vmem:[%s0] sm:$0xff]
    %v25 = vld [vmem:[%s0 + $0x8] sm:$0xff]
    %v26 = vld [vmem:[%s0 + $0x10] sm:$0xff]
    %v27 = vld [vmem:[%s0 + $0x18] sm:$0xff]
    %v28 = vld [vmem:[%s0 + $0x20] sm:$0xff]
    %v29 = vld [vmem:[%s0 + $0x28] sm:$0xff]
    %v30 = vld [vmem:[%s0 + $0x30] sm:$0xff]
    %v31 = vld [vmem:[%s0 + $0x38] sm:$0xff]
    %v32 = vld [vmem:[%s0 + $0x40] sm:$0xff]
    %v33 = vld [vmem:[%s0 + $0x48] sm:$0xff]
    %v34 = vld [vmem:[%s0 + $0x50] sm:$0xff]
    %v35 = vld [vmem:[%s0 + $0x58] sm:$0xff]
    %v36 = vld [vmem:[%s0 + $0x60] sm:$0xff]
    %v37 = vld [vmem:[%s0 + $0x68] sm:$0xff]
    %v38 = vld [vmem:[%s0 + $0x70] sm:$0xff]
    %v39 = vld [vmem:[%s0 + $0x78] sm:$0xff]
    %v40 = vld [vmem:[%s1] sm:$0xff]
    %v41 = vld [vmem:[%s1 + $0x8] sm:$0xff]
    %v42 = vld [vmem:[%s1 + $0x10] sm:$0xff]
    %v43 = vld [vmem:[%s1 + $0x18] sm:$0xff]
    %v44 = vld [vmem:[%s1 + $0x20] sm:$0xff]
    %v45 = vld [vmem:[%s1 + $0x28] sm:$0xff]
    %v46 = vld [vmem:[%s1 + $0x30] sm:$0xff]
    %v47 = vld [vmem:[%s1 + $0x38] sm:$0xff]
    %v48 = vld [vmem:[%s1 + $0x40] sm:$0xff]
    %v49 = vld [vmem:[%s1 + $0x48] sm:$0xff]
    %v50 = vld [vmem:[%s1 + $0x50] sm:$0xff]
    %v51 = vld [vmem:[%s1 + $0x58] sm:$0xff]
    %v52 = vld [vmem:[%s1 + $0x60] sm:$0xff]
    %v53 = vld [vmem:[%s1 + $0x68] sm:$0xff]
    %v54 = vld [vmem:[%s1 + $0x70] sm:$0xff]
    %v55 = vld [vmem:[%s1 + $0x78] sm:$0xff]
    %v56 = vld [vmem:[%s2] sm:$0xff]
    %v57 = vld [vmem:[%s2 + $0x8] sm:$0xff]
    %v58 = vld [vmem:[%s2 + $0x10] sm:$0xff]
    %v59 = vld [vmem:[%s2 + $0x18] sm:$0xff]
    %v60 = vld [vmem:[%s2 + $0x20] sm:$0xff]
    %v61 = vld [vmem:[%s2 + $0x28] sm:$0xff]
    %v62 = vld [vmem:[%s2 + $0x30] sm:$0xff]
    %v63 = vld [vmem:[%s2 + $0x38] sm:$0xff]
    %v64 = vld [vmem:[%s2 + $0x40] sm:$0xff]
    %v65 = vld [vmem:[%s2 + $0x48] sm:$0xff]
    %v66 = vld [vmem:[%s2 + $0x50] sm:$0xff]
    %v67 = vld [vmem:[%s2 + $0x58] sm:$0xff]
    %v68 = vld [vmem:[%s2 + $0x60] sm:$0xff]
    %v69 = vld [vmem:[%s2 + $0x68] sm:$0xff]
    %v70 = vld [vmem:[%s2 + $0x70] sm:$0xff]
    %v71 = vld [vmem:[%s2 + $0x78] sm:$0xff]
    %v72 = vlaneseq
    %v73 = vand.u32 %v72, 127
    %74 = vset.pattern.permute.xlu0 0
    %75 = vperm.xlu0 %74, %v24
    %v76 = vpop.permute.xlu0 %75
    %77 = vset.pattern.permute.xlu0 0
    %78 = vperm.xlu0 %77, %v25
    %v79 = vpop.permute.xlu0 %78
    %80 = vset.pattern.permute.xlu0 0
    %81 = vperm.xlu0 %80, %v26
    %v82 = vpop.permute.xlu0 %81
    %83 = vset.pattern.permute.xlu0 0
    %84 = vperm.xlu0 %83, %v27
    %v85 = vpop.permute.xlu0 %84
    %86 = vset.pattern.permute.xlu0 0
    %87 = vperm.xlu0 %86, %v28
    %v88 = vpop.permute.xlu0 %87
    %89 = vset.pattern.permute.xlu0 0
    %90 = vperm.xlu0 %89, %v29
    %v91 = vpop.permute.xlu0 %90
    %92 = vset.pattern.permute.xlu0 0
    %93 = vperm.xlu0 %92, %v30
    %v94 = vpop.permute.xlu0 %93
    %95 = vset.pattern.permute.xlu0 0
    %96 = vperm.xlu0 %95, %v31
    %v97 = vpop.permute.xlu0 %96
    %98 = vset.pattern.permute.xlu0 0
    %99 = vperm.xlu0 %98, %v32
    %v100 = vpop.permute.xlu0 %99
    %101 = vset.pattern.permute.xlu0 0
    %102 = vperm.xlu0 %101, %v33
    %v103 = vpop.permute.xlu0 %102
    %104 = vset.pattern.permute.xlu0 0
    %105 = vperm.xlu0 %104, %v34
    %v106 = vpop.permute.xlu0 %105
    %107 = vset.pattern.permute.xlu0 0
    %108 = vperm.xlu0 %107, %v35
    %v109 = vpop.permute.xlu0 %108
    %110 = vset.pattern.permute.xlu0 0
    %111 = vperm.xlu0 %110, %v36
    %v112 = vpop.permute.xlu0 %111
    %113 = vset.pattern.permute.xlu0 0
    %114 = vperm.xlu0 %113, %v37
    %v115 = vpop.permute.xlu0 %114
    %116 = vset.pattern.permute.xlu0 0
    %117 = vperm.xlu0 %116, %v38
    %v118 = vpop.permute.xlu0 %117
    %119 = vset.pattern.permute.xlu0 0
    %120 = vperm.xlu0 %119, %v39
    %v121 = vpop.permute.xlu0 %120
    %vm122 = vcmp.eq.s32.totalorder %v73, %v76
    %vm123 = vcmp.eq.s32.totalorder %v73, %v79
    %vm124 = vcmp.eq.s32.totalorder %v73, %v82
    %vm125 = vcmp.eq.s32.totalorder %v73, %v85
    %vm126 = vcmp.eq.s32.totalorder %v73, %v88
    %vm127 = vcmp.eq.s32.totalorder %v73, %v91
    %vm128 = vcmp.eq.s32.totalorder %v73, %v94
    %vm129 = vcmp.eq.s32.totalorder %v73, %v97
    %vm130 = vcmp.eq.s32.totalorder %v73, %v100
    %vm131 = vcmp.eq.s32.totalorder %v73, %v103
    %vm132 = vcmp.eq.s32.totalorder %v73, %v106
    %vm133 = vcmp.eq.s32.totalorder %v73, %v109
    %vm134 = vcmp.eq.s32.totalorder %v73, %v112
    %vm135 = vcmp.eq.s32.totalorder %v73, %v115
    %vm136 = vcmp.eq.s32.totalorder %v73, %v118
    %vm137 = vcmp.eq.s32.totalorder %v73, %v121
    %v138 = vsel %vm122, 1, 0
    %v139 = vsel %vm123, 1, 0
    %v140 = vsel %vm124, 1, 0
    %v141 = vsel %vm125, 1, 0
    %v142 = vsel %vm126, 1, 0
    %v143 = vsel %vm127, 1, 0
    %v144 = vsel %vm128, 1, 0
    %v145 = vsel %vm129, 1, 0
    %v146 = vsel %vm130, 1, 0
    %v147 = vsel %vm131, 1, 0
    %v148 = vsel %vm132, 1, 0
    %v149 = vsel %vm133, 1, 0
    %v150 = vsel %vm134, 1, 0
    %v151 = vsel %vm135, 1, 0
    %v152 = vsel %vm136, 1, 0
    %v153 = vsel %vm137, 1, 0
    %v154 = vcvt.s32.f32 %v138
    %v155 = vcvt.s32.f32 %v139
    %v156 = vcvt.s32.f32 %v140
    %v157 = vcvt.s32.f32 %v141
    %v158 = vcvt.s32.f32 %v142
    %v159 = vcvt.s32.f32 %v143
    %v160 = vcvt.s32.f32 %v144
    %v161 = vcvt.s32.f32 %v145
    %v162 = vcvt.s32.f32 %v146
    %v163 = vcvt.s32.f32 %v147
    %v164 = vcvt.s32.f32 %v148
    %v165 = vcvt.s32.f32 %v149
    %v166 = vcvt.s32.f32 %v150
    %v167 = vcvt.s32.f32 %v151
    %v168 = vcvt.s32.f32 %v152
    %v169 = vcvt.s32.f32 %v153
    %170 = vset.pattern.permute.xlu0 0
    %171 = vperm.xlu0 %170, %v40
    %v172 = vpop.permute.xlu0 %171
    %173 = vset.pattern.permute.xlu0 0
    %174 = vperm.xlu0 %173, %v41
    %v175 = vpop.permute.xlu0 %174
    %176 = vset.pattern.permute.xlu0 0
    %177 = vperm.xlu0 %176, %v42
    %v178 = vpop.permute.xlu0 %177
    %179 = vset.pattern.permute.xlu0 0
    %180 = vperm.xlu0 %179, %v43
    %v181 = vpop.permute.xlu0 %180
    %182 = vset.pattern.permute.xlu0 0
    %183 = vperm.xlu0 %182, %v44
    %v184 = vpop.permute.xlu0 %183
    %185 = vset.pattern.permute.xlu0 0
    %186 = vperm.xlu0 %185, %v45
    %v187 = vpop.permute.xlu0 %186
    %188 = vset.pattern.permute.xlu0 0
    %189 = vperm.xlu0 %188, %v46
    %v190 = vpop.permute.xlu0 %189
    %191 = vset.pattern.permute.xlu0 0
    %192 = vperm.xlu0 %191, %v47
    %v193 = vpop.permute.xlu0 %192
    %194 = vset.pattern.permute.xlu0 0
    %195 = vperm.xlu0 %194, %v48
    %v196 = vpop.permute.xlu0 %195
    %197 = vset.pattern.permute.xlu0 0
    %198 = vperm.xlu0 %197, %v49
    %v199 = vpop.permute.xlu0 %198
    %200 = vset.pattern.permute.xlu0 0
    %201 = vperm.xlu0 %200, %v50
    %v202 = vpop.permute.xlu0 %201
    %203 = vset.pattern.permute.xlu0 0
    %204 = vperm.xlu0 %203, %v51
    %v205 = vpop.permute.xlu0 %204
    %206 = vset.pattern.permute.xlu0 0
    %207 = vperm.xlu0 %206, %v52
    %v208 = vpop.permute.xlu0 %207
    %209 = vset.pattern.permute.xlu0 0
    %210 = vperm.xlu0 %209, %v53
    %v211 = vpop.permute.xlu0 %210
    %212 = vset.pattern.permute.xlu0 0
    %213 = vperm.xlu0 %212, %v54
    %v214 = vpop.permute.xlu0 %213
    %215 = vset.pattern.permute.xlu0 0
    %216 = vperm.xlu0 %215, %v55
    %v217 = vpop.permute.xlu0 %216
    %vm218 = vcmp.ge.s32.totalorder %v73, %v172
    %vm219 = vcmp.ge.s32.totalorder %v73, %v175
    %vm220 = vcmp.ge.s32.totalorder %v73, %v178
    %vm221 = vcmp.ge.s32.totalorder %v73, %v181
    %vm222 = vcmp.ge.s32.totalorder %v73, %v184
    %vm223 = vcmp.ge.s32.totalorder %v73, %v187
    %vm224 = vcmp.ge.s32.totalorder %v73, %v190
    %vm225 = vcmp.ge.s32.totalorder %v73, %v193
    %vm226 = vcmp.ge.s32.totalorder %v73, %v196
    %vm227 = vcmp.ge.s32.totalorder %v73, %v199
    %vm228 = vcmp.ge.s32.totalorder %v73, %v202
    %vm229 = vcmp.ge.s32.totalorder %v73, %v205
    %vm230 = vcmp.ge.s32.totalorder %v73, %v208
    %vm231 = vcmp.ge.s32.totalorder %v73, %v211
    %vm232 = vcmp.ge.s32.totalorder %v73, %v214
    %vm233 = vcmp.ge.s32.totalorder %v73, %v217
    %234 = vset.pattern.permute.xlu0 0
    %235 = vperm.xlu0 %234, %v56
    %v236 = vpop.permute.xlu0 %235
    %237 = vset.pattern.permute.xlu0 0
    %238 = vperm.xlu0 %237, %v57
    %v239 = vpop.permute.xlu0 %238
    %240 = vset.pattern.permute.xlu0 0
    %241 = vperm.xlu0 %240, %v58
    %v242 = vpop.permute.xlu0 %241
    %243 = vset.pattern.permute.xlu0 0
    %244 = vperm.xlu0 %243, %v59
    %v245 = vpop.permute.xlu0 %244
    %246 = vset.pattern.permute.xlu0 0
    %247 = vperm.xlu0 %246, %v60
    %v248 = vpop.permute.xlu0 %247
    %249 = vset.pattern.permute.xlu0 0
    %250 = vperm.xlu0 %249, %v61
    %v251 = vpop.permute.xlu0 %250
    %252 = vset.pattern.permute.xlu0 0
    %253 = vperm.xlu0 %252, %v62
    %v254 = vpop.permute.xlu0 %253
    %255 = vset.pattern.permute.xlu0 0
    %256 = vperm.xlu0 %255, %v63
    %v257 = vpop.permute.xlu0 %256
    %258 = vset.pattern.permute.xlu0 0
    %259 = vperm.xlu0 %258, %v64
    %v260 = vpop.permute.xlu0 %259
    %261 = vset.pattern.permute.xlu0 0
    %262 = vperm.xlu0 %261, %v65
    %v263 = vpop.permute.xlu0 %262
    %264 = vset.pattern.permute.xlu0 0
    %265 = vperm.xlu0 %264, %v66
    %v266 = vpop.permute.xlu0 %265
    %267 = vset.pattern.permute.xlu0 0
    %268 = vperm.xlu0 %267, %v67
    %v269 = vpop.permute.xlu0 %268
    %270 = vset.pattern.permute.xlu0 0
    %271 = vperm.xlu0 %270, %v68
    %v272 = vpop.permute.xlu0 %271
    %273 = vset.pattern.permute.xlu0 0
    %274 = vperm.xlu0 %273, %v69
    %v275 = vpop.permute.xlu0 %274
    %276 = vset.pattern.permute.xlu0 0
    %277 = vperm.xlu0 %276, %v70
    %v278 = vpop.permute.xlu0 %277
    %279 = vset.pattern.permute.xlu0 0
    %280 = vperm.xlu0 %279, %v71
    %v281 = vpop.permute.xlu0 %280
    %vm282 = vcmp.lt.s32.totalorder %v73, %v236
    %vm283 = vcmp.lt.s32.totalorder %v73, %v239
    %vm284 = vcmp.lt.s32.totalorder %v73, %v242
    %vm285 = vcmp.lt.s32.totalorder %v73, %v245
    %vm286 = vcmp.lt.s32.totalorder %v73, %v248
    %vm287 = vcmp.lt.s32.totalorder %v73, %v251
    %vm288 = vcmp.lt.s32.totalorder %v73, %v254
    %vm289 = vcmp.lt.s32.totalorder %v73, %v257
    %vm290 = vcmp.lt.s32.totalorder %v73, %v260
    %vm291 = vcmp.lt.s32.totalorder %v73, %v263
    %vm292 = vcmp.lt.s32.totalorder %v73, %v266
    %vm293 = vcmp.lt.s32.totalorder %v73, %v269
    %vm294 = vcmp.lt.s32.totalorder %v73, %v272
    %vm295 = vcmp.lt.s32.totalorder %v73, %v275
    %vm296 = vcmp.lt.s32.totalorder %v73, %v278
    %vm297 = vcmp.lt.s32.totalorder %v73, %v281
    %vm298 = vmand %vm218, %vm282
    %vm299 = vmand %vm219, %vm283
    %vm300 = vmand %vm220, %vm284
    %vm301 = vmand %vm221, %vm285
    %vm302 = vmand %vm222, %vm286
    %vm303 = vmand %vm223, %vm287
    %vm304 = vmand %vm224, %vm288
    %vm305 = vmand %vm225, %vm289
    %vm306 = vmand %vm226, %vm290
    %vm307 = vmand %vm227, %vm291
    %vm308 = vmand %vm228, %vm292
    %vm309 = vmand %vm229, %vm293
    %vm310 = vmand %vm230, %vm294
    %vm311 = vmand %vm231, %vm295
    %vm312 = vmand %vm232, %vm296
    %vm313 = vmand %vm233, %vm297
    %v314 = vsel %vm298, 1, 0
    %v315 = vsel %vm299, 1, 0
    %v316 = vsel %vm300, 1, 0
    %v317 = vsel %vm301, 1, 0
    %v318 = vsel %vm302, 1, 0
    %v319 = vsel %vm303, 1, 0
    %v320 = vsel %vm304, 1, 0
    %v321 = vsel %vm305, 1, 0
    %v322 = vsel %vm306, 1, 0
    %v323 = vsel %vm307, 1, 0
    %v324 = vsel %vm308, 1, 0
    %v325 = vsel %vm309, 1, 0
    %v326 = vsel %vm310, 1, 0
    %v327 = vsel %vm311, 1, 0
    %v328 = vsel %vm312, 1, 0
    %v329 = vsel %vm313, 1, 0
    %v330 = vcvt.s32.f32 %v314
    %v331 = vcvt.s32.f32 %v315
    %v332 = vcvt.s32.f32 %v316
    %v333 = vcvt.s32.f32 %v317
    %v334 = vcvt.s32.f32 %v318
    %v335 = vcvt.s32.f32 %v319
    %v336 = vcvt.s32.f32 %v320
    %v337 = vcvt.s32.f32 %v321
    %v338 = vcvt.s32.f32 %v322
    %v339 = vcvt.s32.f32 %v323
    %v340 = vcvt.s32.f32 %v324
    %v341 = vcvt.s32.f32 %v325
    %v342 = vcvt.s32.f32 %v326
    %v343 = vcvt.s32.f32 %v327
    %v344 = vcvt.s32.f32 %v328
    %v345 = vcvt.s32.f32 %v329
    %v346 = vld [vmem:[%s3] sm:$0xff]
    %v347 = vld [vmem:[%s3 + $0x8] sm:$0xff]
    %v348 = vld [vmem:[%s3 + $0x10] sm:$0xff]
    %v349 = vld [vmem:[%s3 + $0x18] sm:$0xff]
    %v350 = vld [vmem:[%s3 + $0x20] sm:$0xff]
    %v351 = vld [vmem:[%s3 + $0x28] sm:$0xff]
    %v352 = vld [vmem:[%s3 + $0x30] sm:$0xff]
    %v353 = vld [vmem:[%s3 + $0x38] sm:$0xff]
    %v354 = vld [vmem:[%s3 + $0x40] sm:$0xff]
    %v355 = vld [vmem:[%s3 + $0x48] sm:$0xff]
    %v356 = vld [vmem:[%s3 + $0x50] sm:$0xff]
    %v357 = vld [vmem:[%s3 + $0x58] sm:$0xff]
    %v358 = vld [vmem:[%s3 + $0x60] sm:$0xff]
    %v359 = vld [vmem:[%s3 + $0x68] sm:$0xff]
    %v360 = vld [vmem:[%s3 + $0x70] sm:$0xff]
    %v361 = vld [vmem:[%s3 + $0x78] sm:$0xff]
    %362 = vmatprep.subr.mxu0 0.0
    %363 = vmatpush1.msra.mxu0 %v361
    %364 = vmatprep.subr.mxu0 0.0
    %365 = vmatpush1.msra.mxu0 %v360
    %366 = vmatprep.subr.mxu0 0.0
    %367 = vmatpush1.msra.mxu0 %v359
    %368 = vmatprep.subr.mxu0 0.0
    %369 = vmatpush1.msra.mxu0 %v358
    %370 = vmatprep.subr.mxu0 0.0
    %371 = vmatpush1.msra.mxu0 %v357
    %372 = vmatprep.subr.mxu0 0.0
    %373 = vmatpush1.msra.mxu0 %v356
    %374 = vmatprep.subr.mxu0 0.0
    %375 = vmatpush1.msra.mxu0 %v355
    %376 = vmatprep.subr.mxu0 0.0
    %377 = vmatpush1.msra.mxu0 %v354
    %378 = vmatprep.subr.mxu0 0.0
    %379 = vmatpush1.msra.mxu0 %v353
    %380 = vmatprep.subr.mxu0 0.0
    %381 = vmatpush1.msra.mxu0 %v352
    %382 = vmatprep.subr.mxu0 0.0
    %383 = vmatpush1.msra.mxu0 %v351
    %384 = vmatprep.subr.mxu0 0.0
    %385 = vmatpush1.msra.mxu0 %v350
    %386 = vmatprep.subr.mxu0 0.0
    %387 = vmatpush1.msra.mxu0 %v349
    %388 = vmatprep.subr.mxu0 0.0
    %389 = vmatpush1.msra.mxu0 %v348
    %390 = vmatprep.subr.mxu0 0.0
    %391 = vmatpush1.msra.mxu0 %v347
    %392 = vmatprep.subr.mxu0 0.0
    %393 = vmatpush1.msra.mxu0 %v346
    %394 = vmatprep.subr.mxu0 0.0
    %395 = vmatpush2.msra.mxu0 0.0
    %396 = vmatprep.subr.mxu0 0.0
    %397 = vmatpush2.msra.mxu0 0.0
    %398 = vmatprep.subr.mxu0 0.0
    %399 = vmatpush2.msra.mxu0 0.0
    %400 = vmatprep.subr.mxu0 0.0
    %401 = vmatpush2.msra.mxu0 0.0
    %402 = vmatprep.subr.mxu0 0.0
    %403 = vmatpush2.msra.mxu0 0.0
    %404 = vmatprep.subr.mxu0 0.0
    %405 = vmatpush2.msra.mxu0 0.0
    %406 = vmatprep.subr.mxu0 0.0
    %407 = vmatpush2.msra.mxu0 0.0
    %408 = vmatprep.subr.mxu0 0.0
    %409 = vmatpush2.msra.mxu0 0.0
    %410 = vmatprep.subr.mxu0 0.0
    %411 = vmatpush2.msra.mxu0 0.0
    %412 = vmatprep.subr.mxu0 0.0
    %413 = vmatpush2.msra.mxu0 0.0
    %414 = vmatprep.subr.mxu0 0.0
    %415 = vmatpush2.msra.mxu0 0.0
    %416 = vmatprep.subr.mxu0 0.0
    %417 = vmatpush2.msra.mxu0 0.0
    %418 = vmatprep.subr.mxu0 0.0
    %419 = vmatpush2.msra.mxu0 0.0
    %420 = vmatprep.subr.mxu0 0.0
    %421 = vmatpush2.msra.mxu0 0.0
    %422 = vmatprep.subr.mxu0 0.0
    %423 = vmatpush2.msra.mxu0 0.0
    %424 = vmatprep.subr.mxu0 0.0
    %425 = vmatpush2.msra.mxu0 0.0
    %426 = vmatprep.mubr.f32.mxu0 0.0
    %427 = vmatmul.mubr.f32.gmra.mxu0 %v154
    %v428 = vpop.f32.mrf.mxu0
    %v429 = vadd.f32 0.0, %v428
    %v430 = vpop.f32.mrf.mxu0
    %431 = vmatprep.mubr.f32.mxu0 0.0
    %432 = vmatmul.mubr.f32.gmra.mxu0 %v155
    %v433 = vpop.f32.mrf.mxu0
    %v434 = vadd.f32 0.0, %v433
    %v435 = vpop.f32.mrf.mxu0
    %436 = vmatprep.mubr.f32.mxu0 0.0
    %437 = vmatmul.mubr.f32.gmra.mxu0 %v156
    %v438 = vpop.f32.mrf.mxu0
    %v439 = vadd.f32 0.0, %v438
    %v440 = vpop.f32.mrf.mxu0
    %441 = vmatprep.mubr.f32.mxu0 0.0
    %442 = vmatmul.mubr.f32.gmra.mxu0 %v157
    %v443 = vpop.f32.mrf.mxu0
    %v444 = vadd.f32 0.0, %v443
    %v445 = vpop.f32.mrf.mxu0
    %446 = vmatprep.mubr.f32.mxu0 0.0
    %447 = vmatmul.mubr.f32.gmra.mxu0 %v158
    %v448 = vpop.f32.mrf.mxu0
    %v449 = vadd.f32 0.0, %v448
    %v450 = vpop.f32.mrf.mxu0
    %451 = vmatprep.mubr.f32.mxu0 0.0
    %452 = vmatmul.mubr.f32.gmra.mxu0 %v159
    %v453 = vpop.f32.mrf.mxu0
    %v454 = vadd.f32 0.0, %v453
    %v455 = vpop.f32.mrf.mxu0
    %456 = vmatprep.mubr.f32.mxu0 0.0
    %457 = vmatmul.mubr.f32.gmra.mxu0 %v160
    %v458 = vpop.f32.mrf.mxu0
    %v459 = vadd.f32 0.0, %v458
    %v460 = vpop.f32.mrf.mxu0
    %461 = vmatprep.mubr.f32.mxu0 0.0
    %462 = vmatmul.mubr.f32.gmra.mxu0 %v161
    %v463 = vpop.f32.mrf.mxu0
    %v464 = vadd.f32 0.0, %v463
    %v465 = vpop.f32.mrf.mxu0
    %466 = vmatprep.mubr.f32.mxu0 0.0
    %467 = vmatmul.mubr.f32.gmra.mxu0 %v162
    %v468 = vpop.f32.mrf.mxu0
    %v469 = vadd.f32 0.0, %v468
    %v470 = vpop.f32.mrf.mxu0
    %471 = vmatprep.mubr.f32.mxu0 0.0
    %472 = vmatmul.mubr.f32.gmra.mxu0 %v163
    %v473 = vpop.f32.mrf.mxu0
    %v474 = vadd.f32 0.0, %v473
    %v475 = vpop.f32.mrf.mxu0
    %476 = vmatprep.mubr.f32.mxu0 0.0
    %477 = vmatmul.mubr.f32.gmra.mxu0 %v164
    %v478 = vpop.f32.mrf.mxu0
    %v479 = vadd.f32 0.0, %v478
    %v480 = vpop.f32.mrf.mxu0
    %481 = vmatprep.mubr.f32.mxu0 0.0
    %482 = vmatmul.mubr.f32.gmra.mxu0 %v165
    %v483 = vpop.f32.mrf.mxu0
    %v484 = vadd.f32 0.0, %v483
    %v485 = vpop.f32.mrf.mxu0
    %486 = vmatprep.mubr.f32.mxu0 0.0
    %487 = vmatmul.mubr.f32.gmra.mxu0 %v166
    %v488 = vpop.f32.mrf.mxu0
    %v489 = vadd.f32 0.0, %v488
    %v490 = vpop.f32.mrf.mxu0
    %491 = vmatprep.mubr.f32.mxu0 0.0
    %492 = vmatmul.mubr.f32.gmra.mxu0 %v167
    %v493 = vpop.f32.mrf.mxu0
    %v494 = vadd.f32 0.0, %v493
    %v495 = vpop.f32.mrf.mxu0
    %496 = vmatprep.mubr.f32.mxu0 0.0
    %497 = vmatmul.mubr.f32.gmra.mxu0 %v168
    %v498 = vpop.f32.mrf.mxu0
    %v499 = vadd.f32 0.0, %v498
    %v500 = vpop.f32.mrf.mxu0
    %501 = vmatprep.mubr.f32.mxu0 0.0
    %502 = vmatmul.mubr.f32.gmra.mxu0 %v169
    %v503 = vpop.f32.mrf.mxu0
    %v504 = vadd.f32 0.0, %v503
    %v505 = vpop.f32.mrf.mxu0
    %506 = vdwg.mxu0
    %507 = vmatprep.subr.mxu0 0.0
    %508 = vmatpush1.msra.mxu0 %v504
    %509 = vmatprep.subr.mxu0 0.0
    %510 = vmatpush1.msra.mxu0 %v499
    %511 = vmatprep.subr.mxu0 0.0
    %512 = vmatpush1.msra.mxu0 %v494
    %513 = vmatprep.subr.mxu0 0.0
    %514 = vmatpush1.msra.mxu0 %v489
    %515 = vmatprep.subr.mxu0 0.0
    %516 = vmatpush1.msra.mxu0 %v484
    %517 = vmatprep.subr.mxu0 0.0
    %518 = vmatpush1.msra.mxu0 %v479
    %519 = vmatprep.subr.mxu0 0.0
    %520 = vmatpush1.msra.mxu0 %v474
    %521 = vmatprep.subr.mxu0 0.0
    %522 = vmatpush1.msra.mxu0 %v469
    %523 = vmatprep.subr.mxu0 0.0
    %524 = vmatpush1.msra.mxu0 %v464
    %525 = vmatprep.subr.mxu0 0.0
    %526 = vmatpush1.msra.mxu0 %v459
    %527 = vmatprep.subr.mxu0 0.0
    %528 = vmatpush1.msra.mxu0 %v454
    %529 = vmatprep.subr.mxu0 0.0
    %530 = vmatpush1.msra.mxu0 %v449
    %531 = vmatprep.subr.mxu0 0.0
    %532 = vmatpush1.msra.mxu0 %v444
    %533 = vmatprep.subr.mxu0 0.0
    %534 = vmatpush1.msra.mxu0 %v439
    %535 = vmatprep.subr.mxu0 0.0
    %536 = vmatpush1.msra.mxu0 %v434
    %537 = vmatprep.subr.mxu0 0.0
    %538 = vmatpush1.msra.mxu0 %v429
    %539 = vmatprep.subr.mxu0 0.0
    %540 = vmatpush2.msra.mxu0 0.0
    %541 = vmatprep.subr.mxu0 0.0
    %542 = vmatpush2.msra.mxu0 0.0
    %543 = vmatprep.subr.mxu0 0.0
    %544 = vmatpush2.msra.mxu0 0.0
    %545 = vmatprep.subr.mxu0 0.0
    %546 = vmatpush2.msra.mxu0 0.0
    %547 = vmatprep.subr.mxu0 0.0
    %548 = vmatpush2.msra.mxu0 0.0
    %549 = vmatprep.subr.mxu0 0.0
    %550 = vmatpush2.msra.mxu0 0.0
    %551 = vmatprep.subr.mxu0 0.0
    %552 = vmatpush2.msra.mxu0 0.0
    %553 = vmatprep.subr.mxu0 0.0
    %554 = vmatpush2.msra.mxu0 0.0
    %555 = vmatprep.subr.mxu0 0.0
    %556 = vmatpush2.msra.mxu0 0.0
    %557 = vmatprep.subr.mxu0 0.0
    %558 = vmatpush2.msra.mxu0 0.0
    %559 = vmatprep.subr.mxu0 0.0
    %560 = vmatpush2.msra.mxu0 0.0
    %561 = vmatprep.subr.mxu0 0.0
    %562 = vmatpush2.msra.mxu0 0.0
    %563 = vmatprep.subr.mxu0 0.0
    %564 = vmatpush2.msra.mxu0 0.0
    %565 = vmatprep.subr.mxu0 0.0
    %566 = vmatpush2.msra.mxu0 0.0
    %567 = vmatprep.subr.mxu0 0.0
    %568 = vmatpush2.msra.mxu0 0.0
    %569 = vmatprep.subr.mxu0 0.0
    %570 = vmatpush2.msra.mxu0 0.0
    %571 = vmatprep.mubr.f32.mxu0 0.0
    %572 = vmatmul.mubr.f32.gmra.mxu0 %v330
    %v573 = vpop.f32.mrf.mxu0
    %v574 = vadd.f32 0.0, %v573
    %v575 = vpop.f32.mrf.mxu0
    %576 = vmatprep.mubr.f32.mxu0 0.0
    %577 = vmatmul.mubr.f32.gmra.mxu0 %v331
    %v578 = vpop.f32.mrf.mxu0
    %v579 = vadd.f32 0.0, %v578
    %v580 = vpop.f32.mrf.mxu0
    %581 = vmatprep.mubr.f32.mxu0 0.0
    %582 = vmatmul.mubr.f32.gmra.mxu0 %v332
    %v583 = vpop.f32.mrf.mxu0
    %v584 = vadd.f32 0.0, %v583
    %v585 = vpop.f32.mrf.mxu0
    %586 = vmatprep.mubr.f32.mxu0 0.0
    %587 = vmatmul.mubr.f32.gmra.mxu0 %v333
    %v588 = vpop.f32.mrf.mxu0
    %v589 = vadd.f32 0.0, %v588
    %v590 = vpop.f32.mrf.mxu0
    %591 = vmatprep.mubr.f32.mxu0 0.0
    %592 = vmatmul.mubr.f32.gmra.mxu0 %v334
    %v593 = vpop.f32.mrf.mxu0
    %v594 = vadd.f32 0.0, %v593
    %v595 = vpop.f32.mrf.mxu0
    %596 = vmatprep.mubr.f32.mxu0 0.0
    %597 = vmatmul.mubr.f32.gmra.mxu0 %v335
    %v598 = vpop.f32.mrf.mxu0
    %v599 = vadd.f32 0.0, %v598
    %v600 = vpop.f32.mrf.mxu0
    %601 = vmatprep.mubr.f32.mxu0 0.0
    %602 = vmatmul.mubr.f32.gmra.mxu0 %v336
    %v603 = vpop.f32.mrf.mxu0
    %v604 = vadd.f32 0.0, %v603
    %v605 = vpop.f32.mrf.mxu0
    %606 = vmatprep.mubr.f32.mxu0 0.0
    %607 = vmatmul.mubr.f32.gmra.mxu0 %v337
    %v608 = vpop.f32.mrf.mxu0
    %v609 = vadd.f32 0.0, %v608
    %v610 = vpop.f32.mrf.mxu0
    %611 = vmatprep.mubr.f32.mxu0 0.0
    %612 = vmatmul.mubr.f32.gmra.mxu0 %v338
    %v613 = vpop.f32.mrf.mxu0
    %v614 = vadd.f32 0.0, %v613
    %v615 = vpop.f32.mrf.mxu0
    %616 = vmatprep.mubr.f32.mxu0 0.0
    %617 = vmatmul.mubr.f32.gmra.mxu0 %v339
    %v618 = vpop.f32.mrf.mxu0
    %v619 = vadd.f32 0.0, %v618
    %v620 = vpop.f32.mrf.mxu0
    %621 = vmatprep.mubr.f32.mxu0 0.0
    %622 = vmatmul.mubr.f32.gmra.mxu0 %v340
    %v623 = vpop.f32.mrf.mxu0
    %v624 = vadd.f32 0.0, %v623
    %v625 = vpop.f32.mrf.mxu0
    %626 = vmatprep.mubr.f32.mxu0 0.0
    %627 = vmatmul.mubr.f32.gmra.mxu0 %v341
    %v628 = vpop.f32.mrf.mxu0
    %v629 = vadd.f32 0.0, %v628
    %v630 = vpop.f32.mrf.mxu0
    %631 = vmatprep.mubr.f32.mxu0 0.0
    %632 = vmatmul.mubr.f32.gmra.mxu0 %v342
    %v633 = vpop.f32.mrf.mxu0
    %v634 = vadd.f32 0.0, %v633
    %v635 = vpop.f32.mrf.mxu0
    %636 = vmatprep.mubr.f32.mxu0 0.0
    %637 = vmatmul.mubr.f32.gmra.mxu0 %v343
    %v638 = vpop.f32.mrf.mxu0
    %v639 = vadd.f32 0.0, %v638
    %v640 = vpop.f32.mrf.mxu0
    %641 = vmatprep.mubr.f32.mxu0 0.0
    %642 = vmatmul.mubr.f32.gmra.mxu0 %v344
    %v643 = vpop.f32.mrf.mxu0
    %v644 = vadd.f32 0.0, %v643
    %v645 = vpop.f32.mrf.mxu0
    %646 = vmatprep.mubr.f32.mxu0 0.0
    %647 = vmatmul.mubr.f32.gmra.mxu0 %v345
    %v648 = vpop.f32.mrf.mxu0
    %v649 = vadd.f32 0.0, %v648
    %v650 = vpop.f32.mrf.mxu0
    %651 = vdwg.mxu0
    %v652 = vsub.s32 %v56, %v40
    %v653 = vsub.s32 %v57, %v41
    %v654 = vsub.s32 %v58, %v42
    %v655 = vsub.s32 %v59, %v43
    %v656 = vsub.s32 %v60, %v44
    %v657 = vsub.s32 %v61, %v45
    %v658 = vsub.s32 %v62, %v46
    %v659 = vsub.s32 %v63, %v47
    %v660 = vsub.s32 %v64, %v48
    %v661 = vsub.s32 %v65, %v49
    %v662 = vsub.s32 %v66, %v50
    %v663 = vsub.s32 %v67, %v51
    %v664 = vsub.s32 %v68, %v52
    %v665 = vsub.s32 %v69, %v53
    %v666 = vsub.s32 %v70, %v54
    %v667 = vsub.s32 %v71, %v55
    %v668 = vcvt.s32.f32 %v652
    %v669 = vcvt.s32.f32 %v653
    %v670 = vcvt.s32.f32 %v654
    %v671 = vcvt.s32.f32 %v655
    %v672 = vcvt.s32.f32 %v656
    %v673 = vcvt.s32.f32 %v657
    %v674 = vcvt.s32.f32 %v658
    %v675 = vcvt.s32.f32 %v659
    %v676 = vcvt.s32.f32 %v660
    %v677 = vcvt.s32.f32 %v661
    %v678 = vcvt.s32.f32 %v662
    %v679 = vcvt.s32.f32 %v663
    %v680 = vcvt.s32.f32 %v664
    %v681 = vcvt.s32.f32 %v665
    %v682 = vcvt.s32.f32 %v666
    %v683 = vcvt.s32.f32 %v667
    %v684 = vmax.f32 %v668, 1.0
    %v685 = vmax.f32 %v669, 1.0
    %v686 = vmax.f32 %v670, 1.0
    %v687 = vmax.f32 %v671, 1.0
    %v688 = vmax.f32 %v672, 1.0
    %v689 = vmax.f32 %v673, 1.0
    %v690 = vmax.f32 %v674, 1.0
    %v691 = vmax.f32 %v675, 1.0
    %v692 = vmax.f32 %v676, 1.0
    %v693 = vmax.f32 %v677, 1.0
    %v694 = vmax.f32 %v678, 1.0
    %v695 = vmax.f32 %v679, 1.0
    %v696 = vmax.f32 %v680, 1.0
    %v697 = vmax.f32 %v681, 1.0
    %v698 = vmax.f32 %v682, 1.0
    %v699 = vmax.f32 %v683, 1.0
    %v700 = vrcp.pop %v684
    %v701 = vrcp.pop %v685
    %v702 = vrcp.pop %v686
    %v703 = vrcp.pop %v687
    %v704 = vrcp.pop %v688
    %v705 = vrcp.pop %v689
    %v706 = vrcp.pop %v690
    %v707 = vrcp.pop %v691
    %v708 = vrcp.pop %v692
    %v709 = vrcp.pop %v693
    %v710 = vrcp.pop %v694
    %v711 = vrcp.pop %v695
    %v712 = vrcp.pop %v696
    %v713 = vrcp.pop %v697
    %v714 = vrcp.pop %v698
    %v715 = vrcp.pop %v699
    %717 = vset.pattern.permute.xlu0 0
    %718 = vperm.xlu0 %717, %v700
    %v719 = vpop.permute.xlu0 %718
    %722 = vset.pattern.permute.xlu0 0
    %723 = vperm.xlu0 %722, %v701
    %v724 = vpop.permute.xlu0 %723
    %727 = vset.pattern.permute.xlu0 0
    %728 = vperm.xlu0 %727, %v702
    %v729 = vpop.permute.xlu0 %728
    %732 = vset.pattern.permute.xlu0 0
    %733 = vperm.xlu0 %732, %v703
    %v734 = vpop.permute.xlu0 %733
    %737 = vset.pattern.permute.xlu0 0
    %738 = vperm.xlu0 %737, %v704
    %v739 = vpop.permute.xlu0 %738
    %742 = vset.pattern.permute.xlu0 0
    %743 = vperm.xlu0 %742, %v705
    %v744 = vpop.permute.xlu0 %743
    %747 = vset.pattern.permute.xlu0 0
    %748 = vperm.xlu0 %747, %v706
    %v749 = vpop.permute.xlu0 %748
    %752 = vset.pattern.permute.xlu0 0
    %753 = vperm.xlu0 %752, %v707
    %v754 = vpop.permute.xlu0 %753
    %757 = vset.pattern.permute.xlu0 0
    %758 = vperm.xlu0 %757, %v708
    %v759 = vpop.permute.xlu0 %758
    %762 = vset.pattern.permute.xlu0 0
    %763 = vperm.xlu0 %762, %v709
    %v764 = vpop.permute.xlu0 %763
    %767 = vset.pattern.permute.xlu0 0
    %768 = vperm.xlu0 %767, %v710
    %v769 = vpop.permute.xlu0 %768
    %772 = vset.pattern.permute.xlu0 0
    %773 = vperm.xlu0 %772, %v711
    %v774 = vpop.permute.xlu0 %773
    %777 = vset.pattern.permute.xlu0 0
    %778 = vperm.xlu0 %777, %v712
    %v779 = vpop.permute.xlu0 %778
    %782 = vset.pattern.permute.xlu0 0
    %783 = vperm.xlu0 %782, %v713
    %v784 = vpop.permute.xlu0 %783
    %787 = vset.pattern.permute.xlu0 0
    %788 = vperm.xlu0 %787, %v714
    %v789 = vpop.permute.xlu0 %788
    %792 = vset.pattern.permute.xlu0 0
    %793 = vperm.xlu0 %792, %v715
    %v794 = vpop.permute.xlu0 %793
    %v796 = vmul.f32 %v574, %v719
    %v797 = vmul.f32 %v579, %v724
    %v798 = vmul.f32 %v584, %v729
    %v799 = vmul.f32 %v589, %v734
    %v800 = vmul.f32 %v594, %v739
    %v801 = vmul.f32 %v599, %v744
    %v802 = vmul.f32 %v604, %v749
    %v803 = vmul.f32 %v609, %v754
    %v804 = vmul.f32 %v614, %v759
    %v805 = vmul.f32 %v619, %v764
    %v806 = vmul.f32 %v624, %v769
    %v807 = vmul.f32 %v629, %v774
    %v808 = vmul.f32 %v634, %v779
    %v809 = vmul.f32 %v639, %v784
    %v810 = vmul.f32 %v644, %v789
    %v811 = vmul.f32 %v649, %v794
    %v812 = vld [vmem:[%s4] sm:$0xff]
    %v813 = vld [vmem:[%s4 + $0x8] sm:$0xff]
    %v814 = vld [vmem:[%s4 + $0x10] sm:$0xff]
    %v815 = vld [vmem:[%s4 + $0x18] sm:$0xff]
    %v816 = vld [vmem:[%s4 + $0x20] sm:$0xff]
    %v817 = vld [vmem:[%s4 + $0x28] sm:$0xff]
    %v818 = vld [vmem:[%s4 + $0x30] sm:$0xff]
    %v819 = vld [vmem:[%s4 + $0x38] sm:$0xff]
    %v820 = vld [vmem:[%s4 + $0x40] sm:$0xff]
    %v821 = vld [vmem:[%s4 + $0x48] sm:$0xff]
    %v822 = vld [vmem:[%s4 + $0x50] sm:$0xff]
    %v823 = vld [vmem:[%s4 + $0x58] sm:$0xff]
    %v824 = vld [vmem:[%s4 + $0x60] sm:$0xff]
    %v825 = vld [vmem:[%s4 + $0x68] sm:$0xff]
    %v826 = vld [vmem:[%s4 + $0x70] sm:$0xff]
    %v827 = vld [vmem:[%s4 + $0x78] sm:$0xff]
    %v828 = vld [vmem:[%s5] sm:$0x1]
    %v830 = vlaneseq
    %v831 = vshrl.u32 %v830, 7
    %v832 = vsub.s32 0, %v831
    %v833 = vrot.slane %v828, %v832
    %835 = vmatprep.subr.mxu0 0.0
    %836 = vmatpush1.msra.mxu0 %v827
    %837 = vmatprep.subr.mxu0 0.0
    %838 = vmatpush1.msra.mxu0 %v826
    %839 = vmatprep.subr.mxu0 0.0
    %840 = vmatpush1.msra.mxu0 %v825
    %841 = vmatprep.subr.mxu0 0.0
    %842 = vmatpush1.msra.mxu0 %v824
    %843 = vmatprep.subr.mxu0 0.0
    %844 = vmatpush1.msra.mxu0 %v823
    %845 = vmatprep.subr.mxu0 0.0
    %846 = vmatpush1.msra.mxu0 %v822
    %847 = vmatprep.subr.mxu0 0.0
    %848 = vmatpush1.msra.mxu0 %v821
    %849 = vmatprep.subr.mxu0 0.0
    %850 = vmatpush1.msra.mxu0 %v820
    %851 = vmatprep.subr.mxu0 0.0
    %852 = vmatpush1.msra.mxu0 %v819
    %853 = vmatprep.subr.mxu0 0.0
    %854 = vmatpush1.msra.mxu0 %v818
    %855 = vmatprep.subr.mxu0 0.0
    %856 = vmatpush1.msra.mxu0 %v817
    %857 = vmatprep.subr.mxu0 0.0
    %858 = vmatpush1.msra.mxu0 %v816
    %859 = vmatprep.subr.mxu0 0.0
    %860 = vmatpush1.msra.mxu0 %v815
    %861 = vmatprep.subr.mxu0 0.0
    %862 = vmatpush1.msra.mxu0 %v814
    %863 = vmatprep.subr.mxu0 0.0
    %864 = vmatpush1.msra.mxu0 %v813
    %865 = vmatprep.subr.mxu0 0.0
    %866 = vmatpush1.msra.mxu0 %v812
    %867 = vmatprep.subr.mxu0 0.0
    %868 = vmatpush2.msra.mxu0 0.0
    %869 = vmatprep.subr.mxu0 0.0
    %870 = vmatpush2.msra.mxu0 0.0
    %871 = vmatprep.subr.mxu0 0.0
    %872 = vmatpush2.msra.mxu0 0.0
    %873 = vmatprep.subr.mxu0 0.0
    %874 = vmatpush2.msra.mxu0 0.0
    %875 = vmatprep.subr.mxu0 0.0
    %876 = vmatpush2.msra.mxu0 0.0
    %877 = vmatprep.subr.mxu0 0.0
    %878 = vmatpush2.msra.mxu0 0.0
    %879 = vmatprep.subr.mxu0 0.0
    %880 = vmatpush2.msra.mxu0 0.0
    %881 = vmatprep.subr.mxu0 0.0
    %882 = vmatpush2.msra.mxu0 0.0
    %883 = vmatprep.subr.mxu0 0.0
    %884 = vmatpush2.msra.mxu0 0.0
    %885 = vmatprep.subr.mxu0 0.0
    %886 = vmatpush2.msra.mxu0 0.0
    %887 = vmatprep.subr.mxu0 0.0
    %888 = vmatpush2.msra.mxu0 0.0
    %889 = vmatprep.subr.mxu0 0.0
    %890 = vmatpush2.msra.mxu0 0.0
    %891 = vmatprep.subr.mxu0 0.0
    %892 = vmatpush2.msra.mxu0 0.0
    %893 = vmatprep.subr.mxu0 0.0
    %894 = vmatpush2.msra.mxu0 0.0
    %895 = vmatprep.subr.mxu0 0.0
    %896 = vmatpush2.msra.mxu0 0.0
    %897 = vmatprep.subr.mxu0 0.0
    %898 = vmatpush2.msra.mxu0 0.0
    %899 = vmatprep.mubr.f32.mxu0 0.0
    %900 = vmatmul.mubr.f32.gmra.mxu0 %v796
    %v901 = vpop.f32.mrf.mxu0
    %v902 = vadd.f32 %v833, %v901
    %v903 = vpop.f32.mrf.mxu0
    %904 = vmatprep.mubr.f32.mxu0 0.0
    %905 = vmatmul.mubr.f32.gmra.mxu0 %v797
    %v906 = vpop.f32.mrf.mxu0
    %v907 = vadd.f32 %v833, %v906
    %v908 = vpop.f32.mrf.mxu0
    %909 = vmatprep.mubr.f32.mxu0 0.0
    %910 = vmatmul.mubr.f32.gmra.mxu0 %v798
    %v911 = vpop.f32.mrf.mxu0
    %v912 = vadd.f32 %v833, %v911
    %v913 = vpop.f32.mrf.mxu0
    %914 = vmatprep.mubr.f32.mxu0 0.0
    %915 = vmatmul.mubr.f32.gmra.mxu0 %v799
    %v916 = vpop.f32.mrf.mxu0
    %v917 = vadd.f32 %v833, %v916
    %v918 = vpop.f32.mrf.mxu0
    %919 = vmatprep.mubr.f32.mxu0 0.0
    %920 = vmatmul.mubr.f32.gmra.mxu0 %v800
    %v921 = vpop.f32.mrf.mxu0
    %v922 = vadd.f32 %v833, %v921
    %v923 = vpop.f32.mrf.mxu0
    %924 = vmatprep.mubr.f32.mxu0 0.0
    %925 = vmatmul.mubr.f32.gmra.mxu0 %v801
    %v926 = vpop.f32.mrf.mxu0
    %v927 = vadd.f32 %v833, %v926
    %v928 = vpop.f32.mrf.mxu0
    %929 = vmatprep.mubr.f32.mxu0 0.0
    %930 = vmatmul.mubr.f32.gmra.mxu0 %v802
    %v931 = vpop.f32.mrf.mxu0
    %v932 = vadd.f32 %v833, %v931
    %v933 = vpop.f32.mrf.mxu0
    %934 = vmatprep.mubr.f32.mxu0 0.0
    %935 = vmatmul.mubr.f32.gmra.mxu0 %v803
    %v936 = vpop.f32.mrf.mxu0
    %v937 = vadd.f32 %v833, %v936
    %v938 = vpop.f32.mrf.mxu0
    %939 = vmatprep.mubr.f32.mxu0 0.0
    %940 = vmatmul.mubr.f32.gmra.mxu0 %v804
    %v941 = vpop.f32.mrf.mxu0
    %v942 = vadd.f32 %v833, %v941
    %v943 = vpop.f32.mrf.mxu0
    %944 = vmatprep.mubr.f32.mxu0 0.0
    %945 = vmatmul.mubr.f32.gmra.mxu0 %v805
    %v946 = vpop.f32.mrf.mxu0
    %v947 = vadd.f32 %v833, %v946
    %v948 = vpop.f32.mrf.mxu0
    %949 = vmatprep.mubr.f32.mxu0 0.0
    %950 = vmatmul.mubr.f32.gmra.mxu0 %v806
    %v951 = vpop.f32.mrf.mxu0
    %v952 = vadd.f32 %v833, %v951
    %v953 = vpop.f32.mrf.mxu0
    %954 = vmatprep.mubr.f32.mxu0 0.0
    %955 = vmatmul.mubr.f32.gmra.mxu0 %v807
    %v956 = vpop.f32.mrf.mxu0
    %v957 = vadd.f32 %v833, %v956
    %v958 = vpop.f32.mrf.mxu0
    %959 = vmatprep.mubr.f32.mxu0 0.0
    %960 = vmatmul.mubr.f32.gmra.mxu0 %v808
    %v961 = vpop.f32.mrf.mxu0
    %v962 = vadd.f32 %v833, %v961
    %v963 = vpop.f32.mrf.mxu0
    %964 = vmatprep.mubr.f32.mxu0 0.0
    %965 = vmatmul.mubr.f32.gmra.mxu0 %v809
    %v966 = vpop.f32.mrf.mxu0
    %v967 = vadd.f32 %v833, %v966
    %v968 = vpop.f32.mrf.mxu0
    %969 = vmatprep.mubr.f32.mxu0 0.0
    %970 = vmatmul.mubr.f32.gmra.mxu0 %v810
    %v971 = vpop.f32.mrf.mxu0
    %v972 = vadd.f32 %v833, %v971
    %v973 = vpop.f32.mrf.mxu0
    %974 = vmatprep.mubr.f32.mxu0 0.0
    %975 = vmatmul.mubr.f32.gmra.mxu0 %v811
    %v976 = vpop.f32.mrf.mxu0
    %v977 = vadd.f32 %v833, %v976
    %v978 = vpop.f32.mrf.mxu0
    %979 = vdwg.mxu0
    %980 = vst [vmem:[#allocation2] sm:$0xff] %v902
    %981 = vst [vmem:[#allocation2 + $0x8] sm:$0xff] %v907
    %982 = vst [vmem:[#allocation2 + $0x10] sm:$0xff] %v912
    %983 = vst [vmem:[#allocation2 + $0x18] sm:$0xff] %v917
    %984 = vst [vmem:[#allocation2 + $0x20] sm:$0xff] %v922
    %985 = vst [vmem:[#allocation2 + $0x28] sm:$0xff] %v927
    %986 = vst [vmem:[#allocation2 + $0x30] sm:$0xff] %v932
    %987 = vst [vmem:[#allocation2 + $0x38] sm:$0xff] %v937
    %988 = vst [vmem:[#allocation2 + $0x40] sm:$0xff] %v942
    %989 = vst [vmem:[#allocation2 + $0x48] sm:$0xff] %v947
    %990 = vst [vmem:[#allocation2 + $0x50] sm:$0xff] %v952
    %991 = vst [vmem:[#allocation2 + $0x58] sm:$0xff] %v957
    %992 = vst [vmem:[#allocation2 + $0x60] sm:$0xff] %v962
    %993 = vst [vmem:[#allocation2 + $0x68] sm:$0xff] %v967
    %994 = vst [vmem:[#allocation2 + $0x70] sm:$0xff] %v972
    %995 = vst [vmem:[#allocation2 + $0x78] sm:$0xff] %v977
    // Predicated region
    $region26: #{tpu_custom_call.1} parent=1 // pred_check
      _
    $region27: #{tpu_custom_call.1} parent=1 // pred_check_branch
      %997 = sbr.rel (0) target = $region29
    $region28: #{tpu_custom_call.1} parent=1 // pred_region
      %s999 = ssub.s32 2048, 2048
      %1000 = vsyncadd [#allocation3], %s999
      %s1001 = sshll.u32 [#allocation2], 4
      %s1002 = int_to_ptr.vmem [resolvable:$true] %s1001
      %1007 = dma.vmem_to_hbm [thread:$0]  %s1002, 2048, %s6, [#allocation3], 128, 128, 8
    $region29: #{tpu_custom_call.1} parent=1 // pred_fallthru
      _
    // Predicated region
    $region30: #{tpu_custom_call.1} parent=1 // pred_check
      _
    $region31: #{tpu_custom_call.1} parent=1 // pred_check_branch
      %1009 = sbr.rel (0) target = $region33
    $region32: #{tpu_custom_call.1} parent=1 // pred_region
      %1010 = dma.done [#allocation3], 2048
    $region33: #{tpu_custom_call.1} parent=1 // pred_fallthru
      _
    %1011 = vsyncpa [#allocation3], 1

</llo_original>
